<compile_context>
chip_gen: v5e
topology: v5e:2x2
jax: 0.10.0
libtpu: 0.0.40
codegen_flags: <defaults>
</compile_context>

<pallas_src>
import functools
import math

import jax
import jax.numpy as jnp
from jax.experimental import pallas as pl
from jax.experimental.pallas import tpu as pltpu

_LANES = 128


def _soft_dice_partials_kernel(x_ref, y_ref, numer_ref, denor_ref, *,
                               p, total, block_rows, need_mask):
    # Load the tile in native dtype, upcast on-chip.
    logits = x_ref[...].astype(jnp.float32)
    labels = y_ref[...].astype(jnp.float32)

    probs = jax.nn.sigmoid(logits)

    if need_mask:
        # Mask out lane padding and any out-of-bounds rows of the last block.
        row_start = pl.program_id(0) * block_rows
        row_ids = jax.lax.broadcasted_iota(jnp.int32, probs.shape, 0)
        lane_ids = jax.lax.broadcasted_iota(jnp.int32, probs.shape, 1)
        gidx = (row_start + row_ids) * _LANES + lane_ids
        valid = gidx < total
        probs = jnp.where(valid, probs, 0.0)
        labels = jnp.where(valid, labels, 0.0)

    numer_t = probs * labels
    if p == 1:
        denor_t = probs + labels
    elif p == 2:
        denor_t = probs * probs + labels * labels
    else:
        denor_t = probs ** p + labels ** p

    # Per-lane partial sums (vector accumulation; keeps the scalar path and the
    # big cross-lane reduce out of the hot loop).
    numer_ref[...] = jnp.sum(numer_t, axis=0, keepdims=True)[None]  # (1,1,128)
    denor_ref[...] = jnp.sum(denor_t, axis=0, keepdims=True)[None]  # (1,1,128)


def soft_dice_loss(logits, labels, *, p=1, smooth=1.0, block_rows=2048):
    """Pallas-TPU implementation of SoftDiceLoss.forward.

    Returns a float32 scalar:
        1 - (2*sum(sigmoid(x)*y) + smooth) / (sum(sigmoid(x)^p + y^p) + smooth)
    """
    assert logits.shape == labels.shape
    total = math.prod(logits.shape)

    x = jnp.reshape(logits, (total,))
    y = jnp.reshape(labels, (total,))

    rows = pl.cdiv(total, _LANES)
    padded_total = rows * _LANES
    if padded_total != total:
        # Minimal (<128 element) pad so the flat view reshapes to (rows, 128).
        # Padded elements are masked out inside the kernel.
        x = jnp.pad(x, (0, padded_total - total))
        y = jnp.pad(y, (0, padded_total - total))
    x2 = x.reshape(rows, _LANES)
    y2 = y.reshape(rows, _LANES)

    # Keep block_rows a multiple of 8 (sublane tiling) unless it covers the
    # whole row extent.  Default 2048 rows => 1 MiB f32 per input tile, well
    # under v7x's 64 MiB VMEM even with double buffering.
    block_rows = max(8, (int(block_rows) // 8) * 8)
    block_rows = min(block_rows, rows)
    num_blocks = pl.cdiv(rows, block_rows)

    need_mask = (padded_total != total) or (num_blocks * block_rows != rows)

    kernel = functools.partial(
        _soft_dice_partials_kernel,
        p=p,
        total=total,
        block_rows=block_rows,
        need_mask=need_mask,
    )

    part_numer, part_denor = pl.pallas_call(
        kernel,
        out_shape=(
            jax.ShapeDtypeStruct((num_blocks, 1, _LANES), jnp.float32),
            jax.ShapeDtypeStruct((num_blocks, 1, _LANES), jnp.float32),
        ),
        grid_spec=pltpu.PrefetchScalarGridSpec(
            num_scalar_prefetch=0,
            grid=(num_blocks,),
            in_specs=[
                pl.BlockSpec((block_rows, _LANES), lambda i: (i, 0)),
                pl.BlockSpec((block_rows, _LANES), lambda i: (i, 0)),
            ],
            out_specs=(
                pl.BlockSpec((1, 1, _LANES), lambda i: (i, 0, 0)),
                pl.BlockSpec((1, 1, _LANES), lambda i: (i, 0, 0)),
            ),
        ),
        compiler_params=pltpu.CompilerParams(
            # Each block writes its own partials -> fully parallel grid
            # (lets both TensorCores stream half the data on v7x).
            dimension_semantics=("parallel",),
        ),
    )(x2, y2)

    numer = jnp.sum(part_numer)
    denor = jnp.sum(part_denor)
    s = jnp.float32(smooth)
    return (1.0 - (2.0 * numer + s) / (denor + s)).astype(jnp.float32)


def _reference(logits, labels, p=1, smooth=1.0):
    probs = jax.nn.sigmoid(logits.astype(jnp.float32))
    labels = labels.astype(jnp.float32)
    numer = jnp.sum(probs * labels)
    denor = jnp.sum(probs ** p + labels ** p)
    return 1.0 - (2.0 * numer + smooth) / (denor + smooth)


if __name__ == "__main__":
    key = jax.random.PRNGKey(0)
    k1, k2 = jax.random.split(key)

    # Small binary-segmentation-like shape: (N, C, H, W).
    shape = (2, 4, 16, 16)
    logits = jax.random.normal(k1, shape, dtype=jnp.float32)
    labels = (jax.random.uniform(k2, shape) > 0.5).astype(jnp.float32)

    loss = soft_dice_loss(logits, labels, p=1, smooth=1.0)
    loss = jax.block_until_ready(loss)
    ref = _reference(logits, labels, p=1, smooth=1.0)
    assert jnp.allclose(loss, ref, atol=1e-5, rtol=1e-5), (loss, ref)

    # Also exercise a ragged (mask-needed) shape and p=2.
    shape2 = (3, 5, 7, 11)  # 1155 elements -> not a multiple of 128
    logits2 = jax.random.normal(k1, shape2, dtype=jnp.float32)
    labels2 = (jax.random.uniform(k2, shape2) > 0.5).astype(jnp.float32)
    loss2 = jax.block_until_ready(soft_dice_loss(logits2, labels2, p=2, smooth=1.0))
    ref2 = _reference(logits2, labels2, p=2, smooth=1.0)
    assert jnp.allclose(loss2, ref2, atol=1e-5, rtol=1e-5), (loss2, ref2)

    print("KERNEL_OK")
</pallas_src>

<mosaic_0001>
module attributes {stable_mosaic.version = 11 : i64} {
  func.func @_soft_dice_partials_kernel(%arg0: i32, %arg1: memref<16x128xf32, #tpu.memory_space<vmem>>, %arg2: memref<16x128xf32, #tpu.memory_space<vmem>>, %arg3: memref<1x1x128xf32, #tpu.memory_space<vmem>>, %arg4: memref<1x1x128xf32, #tpu.memory_space<vmem>>) attributes {dimension_semantics = [#tpu.dimension_semantics<parallel>], iteration_bounds = array<i64: 1>, scalar_prefetch = 0 : i64, scratch_operands = 0 : i64, tpu.core_type = #tpu.core_type<tc>, window_params = [{transform_indices = @transform_0, window_bounds = array<i64: 16, 128>}, {transform_indices = @transform_1, window_bounds = array<i64: 16, 128>}, {transform_indices = @transform_2, window_bounds = array<i64: 1, 1, 128>}, {transform_indices = @transform_3, window_bounds = array<i64: 1, 1, 128>}]} {
    %c0 = arith.constant 0 : index
    %c0_0 = arith.constant 0 : index
    %0 = vector.load %arg1[%c0, %c0_0] : memref<16x128xf32, #tpu.memory_space<vmem>>, vector<16x128xf32>
    %c0_1 = arith.constant 0 : index
    %c0_2 = arith.constant 0 : index
    %1 = vector.load %arg2[%c0_1, %c0_2] : memref<16x128xf32, #tpu.memory_space<vmem>>, vector<16x128xf32>
    %2 = arith.negf %0 : vector<16x128xf32>
    %3 = math.exp %2 : vector<16x128xf32>
    %cst = arith.constant 1.000000e+00 : f32
    %4 = vector.broadcast %cst : f32 to vector<16x128xf32>
    %5 = arith.addf %4, %3 : vector<16x128xf32>
    %6 = arith.divf %4, %5 : vector<16x128xf32>
    %7 = arith.mulf %6, %1 : vector<16x128xf32>
    %8 = arith.addf %6, %1 : vector<16x128xf32>
    %cst_3 = arith.constant dense<0.000000e+00> : vector<128xf32>
    %9 = vector.multi_reduction <add>, %7, %cst_3 [0] : vector<16x128xf32> to vector<128xf32>
    %10 = vector.shape_cast %9 : vector<128xf32> to vector<1x128xf32>
    %11 = vector.shape_cast %10 : vector<1x128xf32> to vector<1x1x128xf32>
    %c0_4 = arith.constant 0 : index
    %c0_5 = arith.constant 0 : index
    %c0_6 = arith.constant 0 : index
    %12 = vector.load %arg3[%c0_4, %c0_5, %c0_6] : memref<1x1x128xf32, #tpu.memory_space<vmem>>, vector<1x1x128xf32>
    tpu.vector_store %arg3[%c0_4, %c0_5, %c0_6], %11 {strides = array<i32>} : memref<1x1x128xf32, #tpu.memory_space<vmem>>, vector<1x1x128xf32>,
    %cst_7 = arith.constant dense<0.000000e+00> : vector<128xf32>
    %13 = vector.multi_reduction <add>, %8, %cst_7 [0] : vector<16x128xf32> to vector<128xf32>
    %14 = vector.shape_cast %13 : vector<128xf32> to vector<1x128xf32>
    %15 = vector.shape_cast %14 : vector<1x128xf32> to vector<1x1x128xf32>
    %c0_8 = arith.constant 0 : index
    %c0_9 = arith.constant 0 : index
    %c0_10 = arith.constant 0 : index
    %16 = vector.load %arg4[%c0_8, %c0_9, %c0_10] : memref<1x1x128xf32, #tpu.memory_space<vmem>>, vector<1x1x128xf32>
    tpu.vector_store %arg4[%c0_8, %c0_9, %c0_10], %15 {strides = array<i32>} : memref<1x1x128xf32, #tpu.memory_space<vmem>>, vector<1x1x128xf32>,
    return
  }
  func.func @transform_0(%arg0: i32) -> (i32, i32) {
    %c0_i32 = arith.constant 0 : i32
    %c0_i32_0 = arith.constant 0 : i32
    return %arg0, %c0_i32 : i32, i32
  }
  func.func @transform_1(%arg0: i32) -> (i32, i32) {
    %c0_i32 = arith.constant 0 : i32
    %c0_i32_0 = arith.constant 0 : i32
    return %arg0, %c0_i32 : i32, i32
  }
  func.func @transform_2(%arg0: i32) -> (i32, i32, i32) {
    %c0_i32 = arith.constant 0 : i32
    %c0_i32_0 = arith.constant 0 : i32
    %c0_i32_1 = arith.constant 0 : i32
    return %arg0, %c0_i32, %c0_i32_0 : i32, i32, i32
  }
  func.func @transform_3(%arg0: i32) -> (i32, i32, i32) {
    %c0_i32 = arith.constant 0 : i32
    %c0_i32_0 = arith.constant 0 : i32
    %c0_i32_1 = arith.constant 0 : i32
    return %arg0, %c0_i32, %c0_i32_0 : i32, i32, i32
  }
}

</mosaic_0001>

<llo_original>
// kernel: tpu_custom_call.1
$region0: #{tpu_custom_call.1}
  #allocation0 [shape = 'u32[]', space=smem, size = 0x4, offset = 0x4, fixed_abs, tag = 'smem constant byte address 0x4 - core index']
  #allocation1 [shape = 'u32[72,128]{1,0:T(1,128)}', space=vmem, size = 0x9000, scoped, tag = 'internal scratch']
  %s0 = inlined_call_operand.hbm [shape: f32[16,128], index: 0, kind: input, shape index: {}]
  %s1 = inlined_call_operand.hbm [shape: f32[16,128], index: 1, kind: input, shape index: {}]
  %s2 = inlined_call_operand.hbm [shape: f32[1,1,128], index: 2, kind: output, shape index: {0}]
  %s3 = inlined_call_operand.hbm [shape: f32[1,1,128], index: 3, kind: output, shape index: {1}]
  %4 = xla_tuple %s2, %s3
  %s5 = sld [smem:[#allocation0]]
  $region34: #{tpu_custom_call.1} parent=0
    _
  %s7 = ssub.s32 1, %s5
  %s8 = scalar_select 0, %s7, %s5
  $region1: #{tpu_custom_call.1} parent=0
    #allocation2 [shape = 'u8[8192]{0}', space=vmem, size = 0x2000, scoped, tag = 'input window, operand 0, single buffered']
    #allocation3 [shape = 's32[1]{0}', space=sflag, size = 0x4, scoped, tag = 'scoped memory for tpu_custom_call.1']
    #allocation4 [shape = 's32[1]{0}', space=sflag, size = 0x4, scoped, tag = 'scoped memory for tpu_custom_call.1']
    #allocation5 [shape = 'u8[8192]{0}', space=vmem, size = 0x2000, scoped, tag = 'input window, operand 1, single buffered']
    #allocation6 [shape = 's32[1]{0}', space=sflag, size = 0x4, scoped, tag = 'scoped memory for tpu_custom_call.1']
    #allocation7 [shape = 'u8[512]{0}', space=vmem, size = 0x400, scoped, tag = 'output window, operand 0, single buffered']
    #allocation8 [shape = 'u8[512]{0}', space=vmem, size = 0x400, scoped, tag = 'output window, operand 1, single buffered']
    #allocation9 [shape = 's32[1]{0}', space=sflag, size = 0x4, scoped, tag = 'scoped memory for tpu_custom_call.1']
    %9 = vsyncpa [#allocation3], 0
    %10 = vsyncpa [#allocation6], 0
    %11 = vsyncpa [#allocation4], 0
    %12 = vsyncpa [#allocation9], 0
    // Predicated region
    $region2: #{tpu_custom_call.1} parent=1 // pred_check
      _
    $region3: #{tpu_custom_call.1} parent=1 // pred_check_branch
      %14 = sbr.rel (0) target = $region5
    $region4: #{tpu_custom_call.1} parent=1 // pred_region
      %16 = vsyncadd [#allocation3], 0
      %s17 = sshll.u32 %s0, 4
      %s18 = int_to_ptr.hbm [resolvable:$true] %s17
      %s19 = sshll.u32 [#allocation2], 4
      %s20 = int_to_ptr.vmem [resolvable:$true] %s19
      %25 = dma.hbm_to_vmem [thread:$0]  %s18, 256, %s20, [#allocation3], 128, 128, 8
    $region5: #{tpu_custom_call.1} parent=1 // pred_fallthru
      _
    // Predicated region
    $region6: #{tpu_custom_call.1} parent=1 // pred_check
      _
    $region7: #{tpu_custom_call.1} parent=1 // pred_check_branch
      %27 = sbr.rel (0) target = $region9
    $region8: #{tpu_custom_call.1} parent=1 // pred_region
      %29 = vsyncadd [#allocation6], 0
      %s30 = sshll.u32 %s1, 4
      %s31 = int_to_ptr.hbm [resolvable:$true] %s30
      %s32 = sshll.u32 [#allocation5], 4
      %s33 = int_to_ptr.vmem [resolvable:$true] %s32
      %38 = dma.hbm_to_vmem [thread:$0]  %s31, 256, %s33, [#allocation6], 128, 128, 8
    $region9: #{tpu_custom_call.1} parent=1 // pred_fallthru
      _
    // Predicated region
    $region10: #{tpu_custom_call.1} parent=1 // pred_check
      _
    $region11: #{tpu_custom_call.1} parent=1 // pred_check_branch
      %40 = sbr.rel (0) target = $region13
    $region12: #{tpu_custom_call.1} parent=1 // pred_region
      %42 = dma.done [#allocation3], 256
    $region13: #{tpu_custom_call.1} parent=1 // pred_fallthru
      _
    // Predicated region
    $region14: #{tpu_custom_call.1} parent=1 // pred_check
      _
    $region15: #{tpu_custom_call.1} parent=1 // pred_check_branch
      %44 = sbr.rel (0) target = $region17
    $region16: #{tpu_custom_call.1} parent=1 // pred_region
      %46 = dma.done [#allocation6], 256
    $region17: #{tpu_custom_call.1} parent=1 // pred_fallthru
      _
    %v47 = vld [vmem:[#allocation2] sm:$0xff]
    %v48 = vld [vmem:[#allocation2 + $0x8] sm:$0xff]
    %v49 = vld [vmem:[#allocation5] sm:$0xff]
    %v50 = vld [vmem:[#allocation5 + $0x8] sm:$0xff]
    %v51 = vxor.u32 %v47, 2147483648
    %v52 = vxor.u32 %v48, 2147483648
    %v53 = vmul.f32 %v51, 1.442695
    %v54 = vpow.pop %v53
    %v55 = vmul.f32 %v52, 1.442695
    %v56 = vpow.pop %v55
    %v57 = vadd.f32 %v54, 1.0
    %v58 = vadd.f32 %v56, 1.0
    %v59 = vrcp.pop %v57
    %v60 = vmul.f32 %v57, %v59
    %v61 = vsub.f32 1.0, %v60
    %v62 = vmul.f32 %v59, %v61
    %v63 = vadd.f32 %v59, %v62
    %vm64 = vweird.f32 %v57
    %vm65 = vweird.f32 %v59
    %vm66 = vmor %vm64, %vm65
    %v67 = vsel %vm66, %v59, %v63
    %v68 = vand.u32 2147483647, %v57
    %vm69 = vcmp.eq.f32.partialorder %v68, 8.507059e+37
    %v70 = vand.u32 %v57, 2147483648
    %v71 = vor.u32 1.1754944e-38, %v70
    %v72 = vsel %vm69, %v71, %v67
    %v73 = vmul.f32 1.0, %v72
    %v74 = vrcp.pop %v58
    %v75 = vmul.f32 %v58, %v74
    %v76 = vsub.f32 1.0, %v75
    %v77 = vmul.f32 %v74, %v76
    %v78 = vadd.f32 %v74, %v77
    %vm79 = vweird.f32 %v58
    %vm80 = vweird.f32 %v74
    %vm81 = vmor %vm79, %vm80
    %v82 = vsel %vm81, %v74, %v78
    %v83 = vand.u32 2147483647, %v58
    %vm84 = vcmp.eq.f32.partialorder %v83, 8.507059e+37
    %v85 = vand.u32 %v58, 2147483648
    %v86 = vor.u32 1.1754944e-38, %v85
    %v87 = vsel %vm84, %v86, %v82
    %v88 = vmul.f32 1.0, %v87
    %v89 = vmul.f32 %v73, %v49
    %v90 = vmul.f32 %v88, %v50
    %v91 = vadd.f32 %v73, %v49
    %v92 = vadd.f32 %v88, %v50
    %v93 = vadd.f32 %v89, %v90
    %v94 = vrot.slane %v93, 4
    %v95 = vadd.f32 %v93, %v94
    %v96 = vrot.slane %v95, 2
    %v97 = vadd.f32 %v95, %v96
    %v98 = vrot.slane %v97, 1
    %v99 = vadd.f32 %v97, %v98
    %100 = vst [vmem:[#allocation7] sm:$0x1] %v99
    %v101 = vadd.f32 %v91, %v92
    %v102 = vrot.slane %v101, 4
    %v103 = vadd.f32 %v101, %v102
    %v104 = vrot.slane %v103, 2
    %v105 = vadd.f32 %v103, %v104
    %v106 = vrot.slane %v105, 1
    %v107 = vadd.f32 %v105, %v106
    %108 = vst [vmem:[#allocation8] sm:$0x1] %v107
    // Predicated region
    $region18: #{tpu_custom_call.1} parent=1 // pred_check
      _
    $region19: #{tpu_custom_call.1} parent=1 // pred_check_branch
      %110 = sbr.rel (0) target = $region21
    $region20: #{tpu_custom_call.1} parent=1 // pred_region
      %112 = vsyncadd [#allocation4], 0
      %s114 = sshll.u32 [#allocation7], 4
      %s115 = int_to_ptr.vmem [resolvable:$true] %s114
      %s116 = sshll.u32 %s2, 4
      %s117 = int_to_ptr.hbm [resolvable:$true] %s116
      %119 = dma.vmem_to_hbm [thread:$0]  %s115, 16, %s117, [#allocation4]
    $region21: #{tpu_custom_call.1} parent=1 // pred_fallthru
      _
    // Predicated region
    $region22: #{tpu_custom_call.1} parent=1 // pred_check
      _
    $region23: #{tpu_custom_call.1} parent=1 // pred_check_branch
      %121 = sbr.rel (0) target = $region25
    $region24: #{tpu_custom_call.1} parent=1 // pred_region
      %123 = vsyncadd [#allocation9], 0
      %s125 = sshll.u32 [#allocation8], 4
      %s126 = int_to_ptr.vmem [resolvable:$true] %s125
      %s127 = sshll.u32 %s3, 4
      %s128 = int_to_ptr.hbm [resolvable:$true] %s127
      %130 = dma.vmem_to_hbm [thread:$0]  %s126, 16, %s128, [#allocation9]
    $region25: #{tpu_custom_call.1} parent=1 // pred_fallthru
      _
    // Predicated region
    $region26: #{tpu_custom_call.1} parent=1 // pred_check
      _
    $region27: #{tpu_custom_call.1} parent=1 // pred_check_branch
      %132 = sbr.rel (0) target = $region29
    $region28: #{tpu_custom_call.1} parent=1 // pred_region
      %134 = dma.done [#allocation4], 16
    $region29: #{tpu_custom_call.1} parent=1 // pred_fallthru
      _
    // Predicated region
    $region30: #{tpu_custom_call.1} parent=1 // pred_check
      _
    $region31: #{tpu_custom_call.1} parent=1 // pred_check_branch
      %136 = sbr.rel (0) target = $region33
    $region32: #{tpu_custom_call.1} parent=1 // pred_region
      %138 = dma.done [#allocation9], 16
    $region33: #{tpu_custom_call.1} parent=1 // pred_fallthru
      _
    %139 = vsyncpa [#allocation3], 1
    %140 = vsyncpa [#allocation6], 1
    %141 = vsyncpa [#allocation4], 1
    %142 = vsyncpa [#allocation9], 1

</llo_original>
